<compile_context>
chip_gen: v6e
topology: v6e:2x2x1
jax: 0.10.0
libtpu: 0.0.40
codegen_flags: <defaults>
</compile_context>

<pallas_src>
import functools

import numpy as np
import jax
import jax.numpy as jnp
from jax.experimental import pallas as pl
from jax.experimental.pallas import tpu as pltpu

_LANE = 128   # TPU lane width
_SUB = 8      # f32 sublane alignment (batch tiles)
_BF16_SUB = 16  # bf16 sublane tile height (row-band alignment)


def _rup(x, m):
    return (x + m - 1) // m * m


def _layout(input_size, output_size):
    """Static packing layout: every parameter gets a 16-row-aligned band inside
    a single (rows, lanes) bf16 buffer."""
    h1 = 16 * input_size
    h2 = 16 * output_size
    h2_p = _rup(h2, _LANE)
    out_p = _rup(output_size, _LANE)
    lanes = max(_LANE, h2_p, out_p)
    h1_p = _rup(h1, lanes)
    nk1 = h1_p // lanes                     # lane-wide column chunks of W1
    in_rows = _rup(input_size, _BF16_SUB)   # padded K of the first matmul

    w1_row = 0                              # nk1 chunks, each `in_rows` tall
    w2_row = w1_row + nk1 * in_rows         # h1_p rows   (16-aligned)
    w3_row = w2_row + h1_p                  # h2_p rows   (16-aligned)
    bias_row = w3_row + h2_p                # nk1 b1 rows, then b2, then b3
    rows = bias_row + _rup(nk1 + 2, _BF16_SUB)
    return dict(
        input_size=input_size, output_size=output_size,
        h1=h1, h2=h2, h1_p=h1_p, h2_p=h2_p, out_p=out_p,
        lanes=lanes, nk1=nk1, in_rows=in_rows,
        w1_row=w1_row, w2_row=w2_row, w3_row=w3_row,
        bias_row=bias_row, rows=rows,
    )


def init_actor_params(key, input_size, output_size):
    """Deterministic init mimicking nn.Linear default (uniform +/- 1/sqrt(fan_in)).
    Weights are stored transposed: (in_features, out_features)."""
    h1 = 16 * input_size
    h2 = 16 * output_size
    keys = jax.random.split(key, 6)

    def linear(kw, kb, fan_in, fan_out):
        bound = 1.0 / np.sqrt(fan_in)
        w = jax.random.uniform(kw, (fan_in, fan_out), jnp.float32, -bound, bound)
        b = jax.random.uniform(kb, (1, fan_out), jnp.float32, -bound, bound)
        return w, b

    w1, b1 = linear(keys[0], keys[1], input_size, h1)
    w2, b2 = linear(keys[2], keys[3], h1, h2)
    w3, b3 = linear(keys[4], keys[5], h2, output_size)
    return {"w1": w1, "b1": b1, "w2": w2, "b2": b2, "w3": w3, "b3": b3}


def pack_actor_params(params, input_size, output_size):
    """Pack all weights/biases into one contiguous bf16 buffer (done once)."""
    L = _layout(input_size, output_size)
    lanes = L["lanes"]
    buf = np.zeros((L["rows"], lanes), np.float32)

    w1 = np.asarray(params["w1"], np.float32)              # (in, h1)
    b1 = np.asarray(params["b1"], np.float32).reshape(-1)  # (h1,)
    w2 = np.asarray(params["w2"], np.float32)              # (h1, h2)
    b2 = np.asarray(params["b2"], np.float32).reshape(-1)
    w3 = np.asarray(params["w3"], np.float32)              # (h2, out)
    b3 = np.asarray(params["b3"], np.float32).reshape(-1)

    h1, h2 = L["h1"], L["h2"]
    ins, outs = L["input_size"], L["output_size"]
    for k in range(L["nk1"]):
        c0 = k * lanes
        c1 = min(c0 + lanes, h1)
        if c0 >= h1:
            break
        r = L["w1_row"] + k * L["in_rows"]
        buf[r:r + ins, :c1 - c0] = w1[:, c0:c1]
        buf[L["bias_row"] + k, :c1 - c0] = b1[c0:c1]
    buf[L["w2_row"]:L["w2_row"] + h1, :h2] = w2
    buf[L["bias_row"] + L["nk1"], :h2] = b2
    buf[L["w3_row"]:L["w3_row"] + h2, :outs] = w3
    buf[L["bias_row"] + L["nk1"] + 1, :outs] = b3
    return jnp.asarray(buf, dtype=jnp.bfloat16)


def _make_kernel(L, tb):
    lanes, nk1, in_rows = L["lanes"], L["nk1"], L["in_rows"]
    h2_p, out_p = L["h2_p"], L["out_p"]
    w1_row, w2_row, w3_row = L["w1_row"], L["w2_row"], L["w3_row"]
    bias_row = L["bias_row"]
    pi = np.float32(np.pi)

    def kernel(x_ref, p_ref, o_ref):
        x = x_ref[...].astype(jnp.bfloat16)                        # (tb, in_rows)

        # Layers 1+2 fused as a blocked contraction over the lane-wide chunks
        # of the first hidden dim:
        #   pre2 = sum_k relu(x @ W1[:, chunk_k] + b1[chunk_k]) @ W2[chunk_k, :]
        acc = jnp.zeros((tb, h2_p), jnp.float32)
        for k in range(nk1):                                       # static unroll (small)
            r1 = w1_row + k * in_rows
            w1_k = p_ref[r1:r1 + in_rows, :]                       # (in_rows, lanes) bf16
            b1_k = p_ref[bias_row + k:bias_row + k + 1, :].astype(jnp.float32)
            h1_k = jnp.dot(x, w1_k, preferred_element_type=jnp.float32) + b1_k
            h1_k = jnp.maximum(h1_k, 0.0).astype(jnp.bfloat16)     # relu
            r2 = w2_row + k * lanes
            w2_k = p_ref[r2:r2 + lanes, :h2_p]                     # (lanes, h2_p) bf16
            acc = acc + jnp.dot(h1_k, w2_k, preferred_element_type=jnp.float32)

        b2 = p_ref[bias_row + nk1:bias_row + nk1 + 1, :h2_p].astype(jnp.float32)
        h = jnp.maximum(acc + b2, 0.0).astype(jnp.bfloat16)        # (tb, h2_p)

        w3 = p_ref[w3_row:w3_row + h2_p, :out_p]                   # (h2_p, out_p) bf16
        b3 = p_ref[bias_row + nk1 + 1:bias_row + nk1 + 2, :out_p].astype(jnp.float32)
        y = jnp.dot(h, w3, preferred_element_type=jnp.float32) + b3
        o_ref[...] = jnp.tanh(y) * pi                              # lane-dense store

    return kernel


@functools.partial(jax.jit, static_argnames=("input_size", "output_size", "block_batch"))
def actor_forward(state, packed_params, *, input_size, output_size, block_batch=None):
    """state: (B, input_size) f32. packed_params: output of pack_actor_params."""
    L = _layout(input_size, output_size)
    state = state.astype(jnp.float32)
    batch = state.shape[0]
    if block_batch is None:
        # Single tile at small batch; 512-row tiles at large batch.
        tb = min(_rup(max(batch, 1), _SUB), 512)
    else:
        tb = block_batch
    pb = _rup(batch, tb)
    pad_rows = pb - batch
    pad_cols = L["in_rows"] - input_size          # sublane-align the K dim of fc1
    if pad_rows or pad_cols:
        state = jnp.pad(state, ((0, pad_rows), (0, pad_cols)))

    kernel = _make_kernel(L, tb)
    out = pl.pallas_call(
        kernel,
        out_shape=jax.ShapeDtypeStruct((pb, L["out_p"]), jnp.float32),
        grid=(pb // tb,),
        in_specs=[
            pl.BlockSpec((tb, L["in_rows"]), lambda i: (i, 0)),        # state tile
            pl.BlockSpec((L["rows"], L["lanes"]), lambda i: (0, 0)),   # packed params (resident)
        ],
        out_specs=pl.BlockSpec((tb, L["out_p"]), lambda i: (i, 0)),
        compiler_params=pltpu.CompilerParams(
            dimension_semantics=("parallel",)),
    )(state, packed_params)
    return out[:batch, :output_size]


def _ref_forward(state, params):
    """Plain-JAX reference mirroring the kernel's bf16 weight/activation casts."""
    f32 = jnp.float32
    bf = lambda a: jnp.asarray(a, jnp.bfloat16).astype(f32)
    x = bf(state)
    h1 = bf(jnp.maximum(x @ bf(params["w1"]) + bf(params["b1"]), 0.0))
    h2 = bf(jnp.maximum(h1 @ bf(params["w2"]) + bf(params["b2"]), 0.0))
    y = h2 @ bf(params["w3"]) + bf(params["b3"])
    return jnp.tanh(y) * f32(np.pi)


if __name__ == "__main__":
    key = jax.random.PRNGKey(0)
    k_param, k_state = jax.random.split(key)

    input_size = 32    # state dim  -> hidden1 = 512
    output_size = 8    # action dim -> hidden2 = 128
    batch = 8

    params = init_actor_params(k_param, input_size, output_size)
    packed = pack_actor_params(params, input_size, output_size)
    state = jax.random.normal(k_state, (batch, input_size), dtype=jnp.float32)

    out = actor_forward(state, packed, input_size=input_size, output_size=output_size)
    out = jax.block_until_ready(out)

    ref = _ref_forward(state, params)
    assert out.shape == (batch, output_size)
    assert bool(jnp.allclose(out, ref, atol=2e-2, rtol=2e-2)), (
        f"max abs err {float(jnp.max(jnp.abs(out - ref)))}")

    print("KERNEL_OK")
</pallas_src>

<mosaic_0001>
module attributes {stable_mosaic.version = 11 : i64} {
  func.func @kernel(%arg0: i32, %arg1: memref<8x32xf32, #tpu.memory_space<vmem>>, %arg2: memref<784x128xbf16, #tpu.memory_space<vmem>>, %arg3: memref<8x128xf32, #tpu.memory_space<vmem>>) attributes {dimension_semantics = [#tpu.dimension_semantics<parallel>], iteration_bounds = array<i64: 1>, scalar_prefetch = 0 : i64, scratch_operands = 0 : i64, tpu.core_type = #tpu.core_type<tc>, window_params = [{transform_indices = @transform_0, window_bounds = array<i64: 8, 32>}, {pipeline_mode = #tpu.pipeline_mode<synchronous>, transform_indices = @transform_1, window_bounds = array<i64: 784, 128>}, {transform_indices = @transform_2, window_bounds = array<i64: 8, 128>}]} {
    %c0 = arith.constant 0 : index
    %c0_0 = arith.constant 0 : index
    %0 = vector.load %arg1[%c0, %c0_0] : memref<8x32xf32, #tpu.memory_space<vmem>>, vector<8x32xf32>
    %1 = arith.truncf %0 : vector<8x32xf32> to vector<8x32xbf16>
    %cst = arith.constant 0.000000e+00 : f32
    %2 = vector.broadcast %cst : f32 to vector<8x128xf32>
    %c0_1 = arith.constant 0 : index
    %c0_2 = arith.constant 0 : index
    %3 = vector.load %arg2[%c0_1, %c0_2] : memref<784x128xbf16, #tpu.memory_space<vmem>>, vector<32x128xbf16>
    %c768 = arith.constant 768 : index
    %c0_3 = arith.constant 0 : index
    %4 = vector.load %arg2[%c768, %c0_3] : memref<784x128xbf16, #tpu.memory_space<vmem>>, vector<1x128xbf16>
    %5 = arith.extf %4 : vector<1x128xbf16> to vector<1x128xf32>
    %cst_4 = arith.constant dense<0.000000e+00> : vector<8x128xf32>
    %6 = tpu.matmul %1, %3, %cst_4 {dimension_numbers = #tpu.dot_dimension_numbers<[1], [0], [0], [1], [0, 0, 1, 1], [], []>} : vector<8x32xbf16>, vector<32x128xbf16>, vector<8x128xf32> -> vector<8x128xf32>
    %7 = vector.broadcast %5 : vector<1x128xf32> to vector<8x128xf32>
    %8 = arith.addf %6, %7 : vector<8x128xf32>
    %cst_5 = arith.constant 0.000000e+00 : f32
    %9 = vector.broadcast %cst_5 : f32 to vector<8x128xf32>
    %10 = arith.maximumf %8, %9 : vector<8x128xf32>
    %11 = arith.truncf %10 : vector<8x128xf32> to vector<8x128xbf16>
    %c128 = arith.constant 128 : index
    %c0_6 = arith.constant 0 : index
    %12 = vector.load %arg2[%c128, %c0_6] : memref<784x128xbf16, #tpu.memory_space<vmem>>, vector<128x128xbf16>
    %cst_7 = arith.constant dense<0.000000e+00> : vector<8x128xf32>
    %13 = tpu.matmul %11, %12, %cst_7 {dimension_numbers = #tpu.dot_dimension_numbers<[1], [0], [0], [1], [0, 0, 1, 1], [], []>} : vector<8x128xbf16>, vector<128x128xbf16>, vector<8x128xf32> -> vector<8x128xf32>
    %14 = arith.addf %2, %13 : vector<8x128xf32>
    %c32 = arith.constant 32 : index
    %c0_8 = arith.constant 0 : index
    %15 = vector.load %arg2[%c32, %c0_8] : memref<784x128xbf16, #tpu.memory_space<vmem>>, vector<32x128xbf16>
    %c769 = arith.constant 769 : index
    %c0_9 = arith.constant 0 : index
    %16 = vector.load %arg2[%c769, %c0_9] : memref<784x128xbf16, #tpu.memory_space<vmem>>, vector<1x128xbf16>
    %17 = arith.extf %16 : vector<1x128xbf16> to vector<1x128xf32>
    %cst_10 = arith.constant dense<0.000000e+00> : vector<8x128xf32>
    %18 = tpu.matmul %1, %15, %cst_10 {dimension_numbers = #tpu.dot_dimension_numbers<[1], [0], [0], [1], [0, 0, 1, 1], [], []>} : vector<8x32xbf16>, vector<32x128xbf16>, vector<8x128xf32> -> vector<8x128xf32>
    %19 = vector.broadcast %17 : vector<1x128xf32> to vector<8x128xf32>
    %20 = arith.addf %18, %19 : vector<8x128xf32>
    %cst_11 = arith.constant 0.000000e+00 : f32
    %21 = vector.broadcast %cst_11 : f32 to vector<8x128xf32>
    %22 = arith.maximumf %20, %21 : vector<8x128xf32>
    %23 = arith.truncf %22 : vector<8x128xf32> to vector<8x128xbf16>
    %c256 = arith.constant 256 : index
    %c0_12 = arith.constant 0 : index
    %24 = vector.load %arg2[%c256, %c0_12] : memref<784x128xbf16, #tpu.memory_space<vmem>>, vector<128x128xbf16>
    %cst_13 = arith.constant dense<0.000000e+00> : vector<8x128xf32>
    %25 = tpu.matmul %23, %24, %cst_13 {dimension_numbers = #tpu.dot_dimension_numbers<[1], [0], [0], [1], [0, 0, 1, 1], [], []>} : vector<8x128xbf16>, vector<128x128xbf16>, vector<8x128xf32> -> vector<8x128xf32>
    %26 = arith.addf %14, %25 : vector<8x128xf32>
    %c64 = arith.constant 64 : index
    %c0_14 = arith.constant 0 : index
    %27 = vector.load %arg2[%c64, %c0_14] : memref<784x128xbf16, #tpu.memory_space<vmem>>, vector<32x128xbf16>
    %c770 = arith.constant 770 : index
    %c0_15 = arith.constant 0 : index
    %28 = vector.load %arg2[%c770, %c0_15] : memref<784x128xbf16, #tpu.memory_space<vmem>>, vector<1x128xbf16>
    %29 = arith.extf %28 : vector<1x128xbf16> to vector<1x128xf32>
    %cst_16 = arith.constant dense<0.000000e+00> : vector<8x128xf32>
    %30 = tpu.matmul %1, %27, %cst_16 {dimension_numbers = #tpu.dot_dimension_numbers<[1], [0], [0], [1], [0, 0, 1, 1], [], []>} : vector<8x32xbf16>, vector<32x128xbf16>, vector<8x128xf32> -> vector<8x128xf32>
    %31 = vector.broadcast %29 : vector<1x128xf32> to vector<8x128xf32>
    %32 = arith.addf %30, %31 : vector<8x128xf32>
    %cst_17 = arith.constant 0.000000e+00 : f32
    %33 = vector.broadcast %cst_17 : f32 to vector<8x128xf32>
    %34 = arith.maximumf %32, %33 : vector<8x128xf32>
    %35 = arith.truncf %34 : vector<8x128xf32> to vector<8x128xbf16>
    %c384 = arith.constant 384 : index
    %c0_18 = arith.constant 0 : index
    %36 = vector.load %arg2[%c384, %c0_18] : memref<784x128xbf16, #tpu.memory_space<vmem>>, vector<128x128xbf16>
    %cst_19 = arith.constant dense<0.000000e+00> : vector<8x128xf32>
    %37 = tpu.matmul %35, %36, %cst_19 {dimension_numbers = #tpu.dot_dimension_numbers<[1], [0], [0], [1], [0, 0, 1, 1], [], []>} : vector<8x128xbf16>, vector<128x128xbf16>, vector<8x128xf32> -> vector<8x128xf32>
    %38 = arith.addf %26, %37 : vector<8x128xf32>
    %c96 = arith.constant 96 : index
    %c0_20 = arith.constant 0 : index
    %39 = vector.load %arg2[%c96, %c0_20] : memref<784x128xbf16, #tpu.memory_space<vmem>>, vector<32x128xbf16>
    %c771 = arith.constant 771 : index
    %c0_21 = arith.constant 0 : index
    %40 = vector.load %arg2[%c771, %c0_21] : memref<784x128xbf16, #tpu.memory_space<vmem>>, vector<1x128xbf16>
    %41 = arith.extf %40 : vector<1x128xbf16> to vector<1x128xf32>
    %cst_22 = arith.constant dense<0.000000e+00> : vector<8x128xf32>
    %42 = tpu.matmul %1, %39, %cst_22 {dimension_numbers = #tpu.dot_dimension_numbers<[1], [0], [0], [1], [0, 0, 1, 1], [], []>} : vector<8x32xbf16>, vector<32x128xbf16>, vector<8x128xf32> -> vector<8x128xf32>
    %43 = vector.broadcast %41 : vector<1x128xf32> to vector<8x128xf32>
    %44 = arith.addf %42, %43 : vector<8x128xf32>
    %cst_23 = arith.constant 0.000000e+00 : f32
    %45 = vector.broadcast %cst_23 : f32 to vector<8x128xf32>
    %46 = arith.maximumf %44, %45 : vector<8x128xf32>
    %47 = arith.truncf %46 : vector<8x128xf32> to vector<8x128xbf16>
    %c512 = arith.constant 512 : index
    %c0_24 = arith.constant 0 : index
    %48 = vector.load %arg2[%c512, %c0_24] : memref<784x128xbf16, #tpu.memory_space<vmem>>, vector<128x128xbf16>
    %cst_25 = arith.constant dense<0.000000e+00> : vector<8x128xf32>
    %49 = tpu.matmul %47, %48, %cst_25 {dimension_numbers = #tpu.dot_dimension_numbers<[1], [0], [0], [1], [0, 0, 1, 1], [], []>} : vector<8x128xbf16>, vector<128x128xbf16>, vector<8x128xf32> -> vector<8x128xf32>
    %50 = arith.addf %38, %49 : vector<8x128xf32>
    %c772 = arith.constant 772 : index
    %c0_26 = arith.constant 0 : index
    %51 = vector.load %arg2[%c772, %c0_26] : memref<784x128xbf16, #tpu.memory_space<vmem>>, vector<1x128xbf16>
    %52 = arith.extf %51 : vector<1x128xbf16> to vector<1x128xf32>
    %53 = vector.broadcast %52 : vector<1x128xf32> to vector<8x128xf32>
    %54 = arith.addf %50, %53 : vector<8x128xf32>
    %cst_27 = arith.constant 0.000000e+00 : f32
    %55 = vector.broadcast %cst_27 : f32 to vector<8x128xf32>
    %56 = arith.maximumf %54, %55 : vector<8x128xf32>
    %57 = arith.truncf %56 : vector<8x128xf32> to vector<8x128xbf16>
    %c640 = arith.constant 640 : index
    %c0_28 = arith.constant 0 : index
    %58 = vector.load %arg2[%c640, %c0_28] : memref<784x128xbf16, #tpu.memory_space<vmem>>, vector<128x128xbf16>
    %c773 = arith.constant 773 : index
    %c0_29 = arith.constant 0 : index
    %59 = vector.load %arg2[%c773, %c0_29] : memref<784x128xbf16, #tpu.memory_space<vmem>>, vector<1x128xbf16>
    %60 = arith.extf %59 : vector<1x128xbf16> to vector<1x128xf32>
    %cst_30 = arith.constant dense<0.000000e+00> : vector<8x128xf32>
    %61 = tpu.matmul %57, %58, %cst_30 {dimension_numbers = #tpu.dot_dimension_numbers<[1], [0], [0], [1], [0, 0, 1, 1], [], []>} : vector<8x128xbf16>, vector<128x128xbf16>, vector<8x128xf32> -> vector<8x128xf32>
    %62 = vector.broadcast %60 : vector<1x128xf32> to vector<8x128xf32>
    %63 = arith.addf %61, %62 : vector<8x128xf32>
    %64 = math.tanh %63 : vector<8x128xf32>
    %cst_31 = arith.constant 3.14159274 : f32
    %65 = vector.broadcast %cst_31 : f32 to vector<8x128xf32>
    %66 = arith.mulf %64, %65 : vector<8x128xf32>
    %c0_32 = arith.constant 0 : index
    %c0_33 = arith.constant 0 : index
    %67 = vector.load %arg3[%c0_32, %c0_33] : memref<8x128xf32, #tpu.memory_space<vmem>>, vector<8x128xf32>
    tpu.vector_store %arg3[%c0_32, %c0_33], %66 {strides = array<i32>} : memref<8x128xf32, #tpu.memory_space<vmem>>, vector<8x128xf32>,
    return
  }
  func.func @transform_0(%arg0: i32) -> (i32, i32) {
    %c0_i32 = arith.constant 0 : i32
    %c0_i32_0 = arith.constant 0 : i32
    return %arg0, %c0_i32 : i32, i32
  }
  func.func @transform_1(%arg0: i32) -> (i32, i32) {
    %c0_i32 = arith.constant 0 : i32
    %c0_i32_0 = arith.constant 0 : i32
    %c0_i32_1 = arith.constant 0 : i32
    return %c0_i32, %c0_i32_0 : i32, i32
  }
  func.func @transform_2(%arg0: i32) -> (i32, i32) {
    %c0_i32 = arith.constant 0 : i32
    %c0_i32_0 = arith.constant 0 : i32
    return %arg0, %c0_i32 : i32, i32
  }
}

</mosaic_0001>

<llo_original>
// kernel: actor_forward.1
$region0: #{actor_forward.1}
  #allocation0 [shape = 'u32[]', space=smem, size = 0x4, offset = 0x4, fixed_abs, tag = 'smem constant byte address 0x4 - core index']
  #allocation1 [shape = 'u32[144,128]{1,0:T(1,128)}', space=vmem, size = 0x12000, scoped, tag = 'internal scratch']
  %s0 = inlined_call_operand.hbm [shape: f32[8,32], index: 0, kind: input, shape index: {}]
  %s1 = inlined_call_operand.hbm [shape: bf16[784,128], index: 1, kind: input, shape index: {}]
  %s2 = inlined_call_operand.hbm [shape: f32[8,128], index: 2, kind: output, shape index: {}]
  %s3 = sld [smem:[#allocation0]]
  $region26: #{actor_forward.1} parent=0
    _
  %s5 = ssub.s32 1, %s3
  %s6 = scalar_select 0, %s5, %s3
  $region1: #{actor_forward.1} parent=0
    #allocation2 [shape = 'u8[4096]{0}', space=vmem, size = 0x1000, scoped, tag = 'input window, operand 0, single buffered']
    #allocation3 [shape = 's32[1]{0}', space=sflag, size = 0x4, scoped, tag = 'scoped memory for actor_forward.1']
    #allocation4 [shape = 's32[1]{0}', space=sflag, size = 0x4, scoped, tag = 'scoped memory for actor_forward.1']
    #allocation5 [shape = 'u8[200704]{0}', space=vmem, size = 0x31000, scoped, tag = 'input window, operand 1, single buffered']
    #allocation6 [shape = 's32[1]{0}', space=sflag, size = 0x4, scoped, tag = 'scoped memory for actor_forward.1']
    #allocation7 [shape = 'u8[4096]{0}', space=vmem, size = 0x1000, scoped, tag = 'output window, operand 0, single buffered']
    %7 = vsyncpa [#allocation3], 0
    %8 = vsyncpa [#allocation6], 0
    %9 = vsyncpa [#allocation4], 0
    // Predicated region
    $region2: #{actor_forward.1} parent=1 // pred_check
      _
    $region3: #{actor_forward.1} parent=1 // pred_check_branch
      %11 = sbr.rel (0) target = $region5
    $region4: #{actor_forward.1} parent=1 // pred_region
      %s13 = ssub.s32 128, 128
      %14 = vsyncadd [#allocation3], %s13
      %s16 = sshll.u32 [#allocation2], 4
      %s17 = int_to_ptr.vmem [resolvable:$true] %s16
      %19 = dma.hbm_to_vmem [thread:$0]  %s0, 128, %s17, [#allocation3]
    $region5: #{actor_forward.1} parent=1 // pred_fallthru
      _
    // Predicated region
    $region6: #{actor_forward.1} parent=1 // pred_check
      _
    $region7: #{actor_forward.1} parent=1 // pred_check_branch
      %21 = sbr.rel (0) target = $region9
    $region8: #{actor_forward.1} parent=1 // pred_region
      %s23 = ssub.s32 6272, 6272
      %24 = vsyncadd [#allocation6], %s23
      %s25 = sshll.u32 [#allocation5], 4
      %s26 = int_to_ptr.vmem [resolvable:$true] %s25
      %31 = dma.hbm_to_vmem [thread:$0]  %s1, 6272, %s26, [#allocation6], 64, 64, 4
    $region9: #{actor_forward.1} parent=1 // pred_fallthru
      _
    // Predicated region
    $region10: #{actor_forward.1} parent=1 // pred_check
      _
    $region11: #{actor_forward.1} parent=1 // pred_check_branch
      %33 = sbr.rel (0) target = $region13
    $region12: #{actor_forward.1} parent=1 // pred_region
      %34 = dma.done [#allocation3], 128
    $region13: #{actor_forward.1} parent=1 // pred_fallthru
      _
    // Predicated region
    $region14: #{actor_forward.1} parent=1 // pred_check
      _
    $region15: #{actor_forward.1} parent=1 // pred_check_branch
      %36 = sbr.rel (0) target = $region17
    $region16: #{actor_forward.1} parent=1 // pred_region
      %37 = dma.done [#allocation6], 6272
    $region17: #{actor_forward.1} parent=1 // pred_fallthru
      _
    %v39 = vld [vmem:[#allocation2] sm:$0xff]
    %v40 = vpack.c.bf16 %v39, %v39
    %v41 = vld [vmem:[#allocation5] sm:$0xf]
    %v42 = vld [vmem:[#allocation5 + $0x4] sm:$0xf]
    %v43 = vld [vmem:[#allocation5 + $0x8] sm:$0xf]
    %v44 = vld [vmem:[#allocation5 + $0xc] sm:$0xf]
    %v45 = vld [vmem:[#allocation5 + $0x180] sm:$0x1]
    %v46 = vunpack.c.l.bf16 %v45
    %v47 = vlaneseq
    %v48 = vshrl.u32 %v47, 7
    %v49 = vsub.s32 0, %v48
    %v50 = vrot.slane %v46, %v49
    %v55 = vunpack.c.l.b16 %v41
    %v56 = vunpack.c.l.b16 %v42
    %v57 = vunpack.c.l.b16 %v43
    %v58 = vunpack.c.l.b16 %v44
    %v59 = vpack.c.b16 %v56, %v55
    %v60 = vpack.c.b16 %v58, %v57
    %vm63 = vcmask 261120
    %v65 = vsel %vm63, %v40, 0
    %67 = vmatprep.subr.bf16.mxu0 0
    %68 = vmatpush1.bf16.msra.mxu0 0
    %69 = vmatprep.subr.bf16.mxu0 0
    %70 = vmatpush1.bf16.msra.mxu0 0
    %71 = vmatprep.subr.bf16.mxu0 0
    %72 = vmatpush1.bf16.msra.mxu0 0
    %73 = vmatprep.subr.bf16.mxu0 0
    %74 = vmatpush1.bf16.msra.mxu0 0
    %75 = vmatprep.subr.bf16.mxu0 0
    %76 = vmatpush1.bf16.msra.mxu0 0
    %77 = vmatprep.subr.bf16.mxu0 0
    %78 = vmatpush1.bf16.msra.mxu0 0
    %79 = vmatprep.subr.bf16.mxu0 0
    %80 = vmatpush1.bf16.msra.mxu0 %v60
    %81 = vmatprep.subr.bf16.mxu0 0
    %82 = vmatpush1.bf16.msra.mxu0 %v59
    %83 = vmatprep.subr.bf16.mxu0 0
    %84 = vmatpush2.bf16.msra.mxu0 0
    %85 = vmatprep.subr.bf16.mxu0 0
    %86 = vmatpush2.bf16.msra.mxu0 0
    %87 = vmatprep.subr.bf16.mxu0 0
    %88 = vmatpush2.bf16.msra.mxu0 0
    %89 = vmatprep.subr.bf16.mxu0 0
    %90 = vmatpush2.bf16.msra.mxu0 0
    %91 = vmatprep.subr.bf16.mxu0 0
    %92 = vmatpush2.bf16.msra.mxu0 0
    %93 = vmatprep.subr.bf16.mxu0 0
    %94 = vmatpush2.bf16.msra.mxu0 0
    %95 = vmatprep.subr.bf16.mxu0 0
    %96 = vmatpush2.bf16.msra.mxu0 0
    %97 = vmatprep.subr.bf16.mxu0 0
    %98 = vmatpush2.bf16.msra.mxu0 0
    %99 = vmatprep.mubr.bf16.mxu0 0
    %100 = vmatmul.mubr.bf16.gmra.mxu0 %v65
    %v101 = vpop.f32.mrf.mxu0
    %v102 = vadd.f32 %v50, %v101
    %v103 = vpop.f32.mrf.mxu0
    %v104 = vpop.f32.mrf.mxu0
    %v105 = vpop.f32.mrf.mxu0
    %106 = vdwg.mxu0
    %v107 = vmax.f32 %v102, 0.0
    %v108 = vpack.c.bf16 %v107, %v107
    %v109 = vld [vmem:[#allocation5 + $0x40] sm:$0xf]
    %v110 = vld [vmem:[#allocation5 + $0x44] sm:$0xf]
    %v111 = vld [vmem:[#allocation5 + $0x48] sm:$0xf]
    %v112 = vld [vmem:[#allocation5 + $0x4c] sm:$0xf]
    %v113 = vld [vmem:[#allocation5 + $0x50] sm:$0xf]
    %v114 = vld [vmem:[#allocation5 + $0x54] sm:$0xf]
    %v115 = vld [vmem:[#allocation5 + $0x58] sm:$0xf]
    %v116 = vld [vmem:[#allocation5 + $0x5c] sm:$0xf]
    %v117 = vld [vmem:[#allocation5 + $0x60] sm:$0xf]
    %v118 = vld [vmem:[#allocation5 + $0x64] sm:$0xf]
    %v119 = vld [vmem:[#allocation5 + $0x68] sm:$0xf]
    %v120 = vld [vmem:[#allocation5 + $0x6c] sm:$0xf]
    %v121 = vld [vmem:[#allocation5 + $0x70] sm:$0xf]
    %v122 = vld [vmem:[#allocation5 + $0x74] sm:$0xf]
    %v123 = vld [vmem:[#allocation5 + $0x78] sm:$0xf]
    %v124 = vld [vmem:[#allocation5 + $0x7c] sm:$0xf]
    %v125 = vld [vmem:[#allocation5 + $0x10] sm:$0xf]
    %v126 = vld [vmem:[#allocation5 + $0x14] sm:$0xf]
    %v127 = vld [vmem:[#allocation5 + $0x18] sm:$0xf]
    %v128 = vld [vmem:[#allocation5 + $0x1c] sm:$0xf]
    %v129 = vlaneseq
    %v130 = vshrl.u32 %v129, 7
    %v131 = vsub.s32 1, %v130
    %v132 = vrot.slane %v46, %v131
    %v137 = vunpack.c.l.b16 %v125
    %v138 = vunpack.c.l.b16 %v126
    %v139 = vunpack.c.l.b16 %v127
    %v140 = vunpack.c.l.b16 %v128
    %v141 = vpack.c.b16 %v138, %v137
    %v142 = vpack.c.b16 %v140, %v139
    %145 = vmatprep.subr.bf16.mxu0 0
    %146 = vmatpush1.bf16.msra.mxu0 0
    %147 = vmatprep.subr.bf16.mxu0 0
    %148 = vmatpush1.bf16.msra.mxu0 0
    %149 = vmatprep.subr.bf16.mxu0 0
    %150 = vmatpush1.bf16.msra.mxu0 0
    %151 = vmatprep.subr.bf16.mxu0 0
    %152 = vmatpush1.bf16.msra.mxu0 0
    %153 = vmatprep.subr.bf16.mxu0 0
    %154 = vmatpush1.bf16.msra.mxu0 0
    %155 = vmatprep.subr.bf16.mxu0 0
    %156 = vmatpush1.bf16.msra.mxu0 0
    %157 = vmatprep.subr.bf16.mxu0 0
    %158 = vmatpush1.bf16.msra.mxu0 %v142
    %159 = vmatprep.subr.bf16.mxu0 0
    %160 = vmatpush1.bf16.msra.mxu0 %v141
    %161 = vmatprep.subr.bf16.mxu0 0
    %162 = vmatpush2.bf16.msra.mxu0 0
    %163 = vmatprep.subr.bf16.mxu0 0
    %164 = vmatpush2.bf16.msra.mxu0 0
    %165 = vmatprep.subr.bf16.mxu0 0
    %166 = vmatpush2.bf16.msra.mxu0 0
    %167 = vmatprep.subr.bf16.mxu0 0
    %168 = vmatpush2.bf16.msra.mxu0 0
    %169 = vmatprep.subr.bf16.mxu0 0
    %170 = vmatpush2.bf16.msra.mxu0 0
    %171 = vmatprep.subr.bf16.mxu0 0
    %172 = vmatpush2.bf16.msra.mxu0 0
    %173 = vmatprep.subr.bf16.mxu0 0
    %174 = vmatpush2.bf16.msra.mxu0 0
    %175 = vmatprep.subr.bf16.mxu0 0
    %176 = vmatpush2.bf16.msra.mxu0 0
    %177 = vmatprep.mubr.bf16.mxu0 0
    %178 = vmatmul.mubr.bf16.gmra.mxu0 %v65
    %v179 = vpop.f32.mrf.mxu0
    %v180 = vadd.f32 %v132, %v179
    %v181 = vpop.f32.mrf.mxu0
    %v182 = vpop.f32.mrf.mxu0
    %v183 = vpop.f32.mrf.mxu0
    %184 = vdwg.mxu0
    %v185 = vmax.f32 %v180, 0.0
    %v186 = vpack.c.bf16 %v185, %v185
    %v187 = vld [vmem:[#allocation5 + $0x80] sm:$0xf]
    %v188 = vld [vmem:[#allocation5 + $0x84] sm:$0xf]
    %v189 = vld [vmem:[#allocation5 + $0x88] sm:$0xf]
    %v190 = vld [vmem:[#allocation5 + $0x8c] sm:$0xf]
    %v191 = vld [vmem:[#allocation5 + $0x90] sm:$0xf]
    %v192 = vld [vmem:[#allocation5 + $0x94] sm:$0xf]
    %v193 = vld [vmem:[#allocation5 + $0x98] sm:$0xf]
    %v194 = vld [vmem:[#allocation5 + $0x9c] sm:$0xf]
    %v195 = vld [vmem:[#allocation5 + $0xa0] sm:$0xf]
    %v196 = vld [vmem:[#allocation5 + $0xa4] sm:$0xf]
    %v197 = vld [vmem:[#allocation5 + $0xa8] sm:$0xf]
    %v198 = vld [vmem:[#allocation5 + $0xac] sm:$0xf]
    %v199 = vld [vmem:[#allocation5 + $0xb0] sm:$0xf]
    %v200 = vld [vmem:[#allocation5 + $0xb4] sm:$0xf]
    %v201 = vld [vmem:[#allocation5 + $0xb8] sm:$0xf]
    %v202 = vld [vmem:[#allocation5 + $0xbc] sm:$0xf]
    %v219 = vunpack.c.l.b16 %v187
    %v220 = vunpack.c.l.b16 %v188
    %v221 = vunpack.c.l.b16 %v189
    %v222 = vunpack.c.l.b16 %v190
    %v223 = vunpack.c.l.b16 %v191
    %v224 = vunpack.c.l.b16 %v192
    %v225 = vunpack.c.l.b16 %v193
    %v226 = vunpack.c.l.b16 %v194
    %v227 = vunpack.c.l.b16 %v195
    %v228 = vunpack.c.l.b16 %v196
    %v229 = vunpack.c.l.b16 %v197
    %v230 = vunpack.c.l.b16 %v198
    %v231 = vunpack.c.l.b16 %v199
    %v232 = vunpack.c.l.b16 %v200
    %v233 = vunpack.c.l.b16 %v201
    %v234 = vunpack.c.l.b16 %v202
    %v235 = vpack.c.b16 %v220, %v219
    %v236 = vpack.c.b16 %v222, %v221
    %v237 = vpack.c.b16 %v224, %v223
    %v238 = vpack.c.b16 %v226, %v225
    %v239 = vpack.c.b16 %v228, %v227
    %v240 = vpack.c.b16 %v230, %v229
    %v241 = vpack.c.b16 %v232, %v231
    %v242 = vpack.c.b16 %v234, %v233
    %251 = vmatprep.subr.bf16.mxu0 0
    %252 = vmatpush1.bf16.msra.mxu0 %v242
    %253 = vmatprep.subr.bf16.mxu0 0
    %254 = vmatpush1.bf16.msra.mxu0 %v241
    %255 = vmatprep.subr.bf16.mxu0 0
    %256 = vmatpush1.bf16.msra.mxu0 %v240
    %257 = vmatprep.subr.bf16.mxu0 0
    %258 = vmatpush1.bf16.msra.mxu0 %v239
    %259 = vmatprep.subr.bf16.mxu0 0
    %260 = vmatpush1.bf16.msra.mxu0 %v238
    %261 = vmatprep.subr.bf16.mxu0 0
    %262 = vmatpush1.bf16.msra.mxu0 %v237
    %263 = vmatprep.subr.bf16.mxu0 0
    %264 = vmatpush1.bf16.msra.mxu0 %v236
    %265 = vmatprep.subr.bf16.mxu0 0
    %266 = vmatpush1.bf16.msra.mxu0 %v235
    %267 = vmatprep.subr.bf16.mxu0 0
    %268 = vmatpush2.bf16.msra.mxu0 0
    %269 = vmatprep.subr.bf16.mxu0 0
    %270 = vmatpush2.bf16.msra.mxu0 0
    %271 = vmatprep.subr.bf16.mxu0 0
    %272 = vmatpush2.bf16.msra.mxu0 0
    %273 = vmatprep.subr.bf16.mxu0 0
    %274 = vmatpush2.bf16.msra.mxu0 0
    %275 = vmatprep.subr.bf16.mxu0 0
    %276 = vmatpush2.bf16.msra.mxu0 0
    %277 = vmatprep.subr.bf16.mxu0 0
    %278 = vmatpush2.bf16.msra.mxu0 0
    %279 = vmatprep.subr.bf16.mxu0 0
    %280 = vmatpush2.bf16.msra.mxu0 0
    %281 = vmatprep.subr.bf16.mxu0 0
    %282 = vmatpush2.bf16.msra.mxu0 0
    %283 = vmatprep.mubr.bf16.mxu0 0
    %284 = vmatmul.mubr.bf16.gmra.mxu0 %v186
    %v285 = vpop.f32.mrf.mxu0
    %v286 = vadd.f32 0.0, %v285
    %v287 = vpop.f32.mrf.mxu0
    %v288 = vpop.f32.mrf.mxu0
    %v289 = vpop.f32.mrf.mxu0
    %290 = vdwg.mxu0
    %v307 = vunpack.c.l.b16 %v109
    %v308 = vunpack.c.l.b16 %v110
    %v309 = vunpack.c.l.b16 %v111
    %v310 = vunpack.c.l.b16 %v112
    %v311 = vunpack.c.l.b16 %v113
    %v312 = vunpack.c.l.b16 %v114
    %v313 = vunpack.c.l.b16 %v115
    %v314 = vunpack.c.l.b16 %v116
    %v315 = vunpack.c.l.b16 %v117
    %v316 = vunpack.c.l.b16 %v118
    %v317 = vunpack.c.l.b16 %v119
    %v318 = vunpack.c.l.b16 %v120
    %v319 = vunpack.c.l.b16 %v121
    %v320 = vunpack.c.l.b16 %v122
    %v321 = vunpack.c.l.b16 %v123
    %v322 = vunpack.c.l.b16 %v124
    %v323 = vpack.c.b16 %v308, %v307
    %v324 = vpack.c.b16 %v310, %v309
    %v325 = vpack.c.b16 %v312, %v311
    %v326 = vpack.c.b16 %v314, %v313
    %v327 = vpack.c.b16 %v316, %v315
    %v328 = vpack.c.b16 %v318, %v317
    %v329 = vpack.c.b16 %v320, %v319
    %v330 = vpack.c.b16 %v322, %v321
    %339 = vmatprep.subr.bf16.mxu0 0
    %340 = vmatpush1.bf16.msra.mxu0 %v330
    %341 = vmatprep.subr.bf16.mxu0 0
    %342 = vmatpush1.bf16.msra.mxu0 %v329
    %343 = vmatprep.subr.bf16.mxu0 0
    %344 = vmatpush1.bf16.msra.mxu0 %v328
    %345 = vmatprep.subr.bf16.mxu0 0
    %346 = vmatpush1.bf16.msra.mxu0 %v327
    %347 = vmatprep.subr.bf16.mxu0 0
    %348 = vmatpush1.bf16.msra.mxu0 %v326
    %349 = vmatprep.subr.bf16.mxu0 0
    %350 = vmatpush1.bf16.msra.mxu0 %v325
    %351 = vmatprep.subr.bf16.mxu0 0
    %352 = vmatpush1.bf16.msra.mxu0 %v324
    %353 = vmatprep.subr.bf16.mxu0 0
    %354 = vmatpush1.bf16.msra.mxu0 %v323
    %355 = vmatprep.subr.bf16.mxu0 0
    %356 = vmatpush2.bf16.msra.mxu0 0
    %357 = vmatprep.subr.bf16.mxu0 0
    %358 = vmatpush2.bf16.msra.mxu0 0
    %359 = vmatprep.subr.bf16.mxu0 0
    %360 = vmatpush2.bf16.msra.mxu0 0
    %361 = vmatprep.subr.bf16.mxu0 0
    %362 = vmatpush2.bf16.msra.mxu0 0
    %363 = vmatprep.subr.bf16.mxu0 0
    %364 = vmatpush2.bf16.msra.mxu0 0
    %365 = vmatprep.subr.bf16.mxu0 0
    %366 = vmatpush2.bf16.msra.mxu0 0
    %367 = vmatprep.subr.bf16.mxu0 0
    %368 = vmatpush2.bf16.msra.mxu0 0
    %369 = vmatprep.subr.bf16.mxu0 0
    %370 = vmatpush2.bf16.msra.mxu0 0
    %371 = vmatprep.mubr.bf16.mxu0 0
    %372 = vmatmul.mubr.bf16.gmra.mxu0 %v108
    %v373 = vpop.f32.mrf.mxu0
    %v374 = vadd.f32 %v286, %v373
    %v375 = vpop.f32.mrf.mxu0
    %v376 = vpop.f32.mrf.mxu0
    %v377 = vpop.f32.mrf.mxu0
    %378 = vdwg.mxu0
    %v379 = vld [vmem:[#allocation5 + $0x20] sm:$0xf]
    %v380 = vld [vmem:[#allocation5 + $0x24] sm:$0xf]
    %v381 = vld [vmem:[#allocation5 + $0x28] sm:$0xf]
    %v382 = vld [vmem:[#allocation5 + $0x2c] sm:$0xf]
    %v383 = vld [vmem:[#allocation5 + $0x180] sm:$0x2]
    %v384 = vunpack.c.l.bf16 %v383
    %v385 = vlaneseq
    %v386 = vshrl.u32 %v385, 7
    %v387 = vsub.s32 2, %v386
    %v388 = vrot.slane %v384, %v387
    %v393 = vunpack.c.l.b16 %v379
    %v394 = vunpack.c.l.b16 %v380
    %v395 = vunpack.c.l.b16 %v381
    %v396 = vunpack.c.l.b16 %v382
    %v397 = vpack.c.b16 %v394, %v393
    %v398 = vpack.c.b16 %v396, %v395
    %401 = vmatprep.subr.bf16.mxu0 0
    %402 = vmatpush1.bf16.msra.mxu0 0
    %403 = vmatprep.subr.bf16.mxu0 0
    %404 = vmatpush1.bf16.msra.mxu0 0
    %405 = vmatprep.subr.bf16.mxu0 0
    %406 = vmatpush1.bf16.msra.mxu0 0
    %407 = vmatprep.subr.bf16.mxu0 0
    %408 = vmatpush1.bf16.msra.mxu0 0
    %409 = vmatprep.subr.bf16.mxu0 0
    %410 = vmatpush1.bf16.msra.mxu0 0
    %411 = vmatprep.subr.bf16.mxu0 0
    %412 = vmatpush1.bf16.msra.mxu0 0
    %413 = vmatprep.subr.bf16.mxu0 0
    %414 = vmatpush1.bf16.msra.mxu0 %v398
    %415 = vmatprep.subr.bf16.mxu0 0
    %416 = vmatpush1.bf16.msra.mxu0 %v397
    %417 = vmatprep.subr.bf16.mxu0 0
    %418 = vmatpush2.bf16.msra.mxu0 0
    %419 = vmatprep.subr.bf16.mxu0 0
    %420 = vmatpush2.bf16.msra.mxu0 0
    %421 = vmatprep.subr.bf16.mxu0 0
    %422 = vmatpush2.bf16.msra.mxu0 0
    %423 = vmatprep.subr.bf16.mxu0 0
    %424 = vmatpush2.bf16.msra.mxu0 0
    %425 = vmatprep.subr.bf16.mxu0 0
    %426 = vmatpush2.bf16.msra.mxu0 0
    %427 = vmatprep.subr.bf16.mxu0 0
    %428 = vmatpush2.bf16.msra.mxu0 0
    %429 = vmatprep.subr.bf16.mxu0 0
    %430 = vmatpush2.bf16.msra.mxu0 0
    %431 = vmatprep.subr.bf16.mxu0 0
    %432 = vmatpush2.bf16.msra.mxu0 0
    %433 = vmatprep.mubr.bf16.mxu0 0
    %434 = vmatmul.mubr.bf16.gmra.mxu0 %v65
    %v435 = vpop.f32.mrf.mxu0
    %v436 = vadd.f32 %v388, %v435
    %v437 = vpop.f32.mrf.mxu0
    %v438 = vpop.f32.mrf.mxu0
    %v439 = vpop.f32.mrf.mxu0
    %440 = vdwg.mxu0
    %v441 = vmax.f32 %v436, 0.0
    %v442 = vpack.c.bf16 %v441, %v441
    %v443 = vld [vmem:[#allocation5 + $0xc0] sm:$0xf]
    %v444 = vld [vmem:[#allocation5 + $0xc4] sm:$0xf]
    %v445 = vld [vmem:[#allocation5 + $0xc8] sm:$0xf]
    %v446 = vld [vmem:[#allocation5 + $0xcc] sm:$0xf]
    %v447 = vld [vmem:[#allocation5 + $0xd0] sm:$0xf]
    %v448 = vld [vmem:[#allocation5 + $0xd4] sm:$0xf]
    %v449 = vld [vmem:[#allocation5 + $0xd8] sm:$0xf]
    %v450 = vld [vmem:[#allocation5 + $0xdc] sm:$0xf]
    %v451 = vld [vmem:[#allocation5 + $0xe0] sm:$0xf]
    %v452 = vld [vmem:[#allocation5 + $0xe4] sm:$0xf]
    %v453 = vld [vmem:[#allocation5 + $0xe8] sm:$0xf]
    %v454 = vld [vmem:[#allocation5 + $0xec] sm:$0xf]
    %v455 = vld [vmem:[#allocation5 + $0xf0] sm:$0xf]
    %v456 = vld [vmem:[#allocation5 + $0xf4] sm:$0xf]
    %v457 = vld [vmem:[#allocation5 + $0xf8] sm:$0xf]
    %v458 = vld [vmem:[#allocation5 + $0xfc] sm:$0xf]
    %v475 = vunpack.c.l.b16 %v443
    %v476 = vunpack.c.l.b16 %v444
    %v477 = vunpack.c.l.b16 %v445
    %v478 = vunpack.c.l.b16 %v446
    %v479 = vunpack.c.l.b16 %v447
    %v480 = vunpack.c.l.b16 %v448
    %v481 = vunpack.c.l.b16 %v449
    %v482 = vunpack.c.l.b16 %v450
    %v483 = vunpack.c.l.b16 %v451
    %v484 = vunpack.c.l.b16 %v452
    %v485 = vunpack.c.l.b16 %v453
    %v486 = vunpack.c.l.b16 %v454
    %v487 = vunpack.c.l.b16 %v455
    %v488 = vunpack.c.l.b16 %v456
    %v489 = vunpack.c.l.b16 %v457
    %v490 = vunpack.c.l.b16 %v458
    %v491 = vpack.c.b16 %v476, %v475
    %v492 = vpack.c.b16 %v478, %v477
    %v493 = vpack.c.b16 %v480, %v479
    %v494 = vpack.c.b16 %v482, %v481
    %v495 = vpack.c.b16 %v484, %v483
    %v496 = vpack.c.b16 %v486, %v485
    %v497 = vpack.c.b16 %v488, %v487
    %v498 = vpack.c.b16 %v490, %v489
    %507 = vmatprep.subr.bf16.mxu0 0
    %508 = vmatpush1.bf16.msra.mxu0 %v498
    %509 = vmatprep.subr.bf16.mxu0 0
    %510 = vmatpush1.bf16.msra.mxu0 %v497
    %511 = vmatprep.subr.bf16.mxu0 0
    %512 = vmatpush1.bf16.msra.mxu0 %v496
    %513 = vmatprep.subr.bf16.mxu0 0
    %514 = vmatpush1.bf16.msra.mxu0 %v495
    %515 = vmatprep.subr.bf16.mxu0 0
    %516 = vmatpush1.bf16.msra.mxu0 %v494
    %517 = vmatprep.subr.bf16.mxu0 0
    %518 = vmatpush1.bf16.msra.mxu0 %v493
    %519 = vmatprep.subr.bf16.mxu0 0
    %520 = vmatpush1.bf16.msra.mxu0 %v492
    %521 = vmatprep.subr.bf16.mxu0 0
    %522 = vmatpush1.bf16.msra.mxu0 %v491
    %523 = vmatprep.subr.bf16.mxu0 0
    %524 = vmatpush2.bf16.msra.mxu0 0
    %525 = vmatprep.subr.bf16.mxu0 0
    %526 = vmatpush2.bf16.msra.mxu0 0
    %527 = vmatprep.subr.bf16.mxu0 0
    %528 = vmatpush2.bf16.msra.mxu0 0
    %529 = vmatprep.subr.bf16.mxu0 0
    %530 = vmatpush2.bf16.msra.mxu0 0
    %531 = vmatprep.subr.bf16.mxu0 0
    %532 = vmatpush2.bf16.msra.mxu0 0
    %533 = vmatprep.subr.bf16.mxu0 0
    %534 = vmatpush2.bf16.msra.mxu0 0
    %535 = vmatprep.subr.bf16.mxu0 0
    %536 = vmatpush2.bf16.msra.mxu0 0
    %537 = vmatprep.subr.bf16.mxu0 0
    %538 = vmatpush2.bf16.msra.mxu0 0
    %539 = vmatprep.mubr.bf16.mxu0 0
    %540 = vmatmul.mubr.bf16.gmra.mxu0 %v442
    %v541 = vpop.f32.mrf.mxu0
    %v542 = vadd.f32 0.0, %v541
    %v543 = vpop.f32.mrf.mxu0
    %v544 = vpop.f32.mrf.mxu0
    %v545 = vpop.f32.mrf.mxu0
    %546 = vdwg.mxu0
    %v547 = vadd.f32 %v374, %v542
    %v548 = vld [vmem:[#allocation5 + $0x30] sm:$0xf]
    %v549 = vld [vmem:[#allocation5 + $0x34] sm:$0xf]
    %v550 = vld [vmem:[#allocation5 + $0x38] sm:$0xf]
    %v551 = vld [vmem:[#allocation5 + $0x3c] sm:$0xf]
    %v552 = vlaneseq
    %v553 = vshrl.u32 %v552, 7
    %v554 = vsub.s32 3, %v553
    %v555 = vrot.slane %v384, %v554
    %v560 = vunpack.c.l.b16 %v548
    %v561 = vunpack.c.l.b16 %v549
    %v562 = vunpack.c.l.b16 %v550
    %v563 = vunpack.c.l.b16 %v551
    %v564 = vpack.c.b16 %v561, %v560
    %v565 = vpack.c.b16 %v563, %v562
    %568 = vmatprep.subr.bf16.mxu0 0
    %569 = vmatpush1.bf16.msra.mxu0 0
    %570 = vmatprep.subr.bf16.mxu0 0
    %571 = vmatpush1.bf16.msra.mxu0 0
    %572 = vmatprep.subr.bf16.mxu0 0
    %573 = vmatpush1.bf16.msra.mxu0 0
    %574 = vmatprep.subr.bf16.mxu0 0
    %575 = vmatpush1.bf16.msra.mxu0 0
    %576 = vmatprep.subr.bf16.mxu0 0
    %577 = vmatpush1.bf16.msra.mxu0 0
    %578 = vmatprep.subr.bf16.mxu0 0
    %579 = vmatpush1.bf16.msra.mxu0 0
    %580 = vmatprep.subr.bf16.mxu0 0
    %581 = vmatpush1.bf16.msra.mxu0 %v565
    %582 = vmatprep.subr.bf16.mxu0 0
    %583 = vmatpush1.bf16.msra.mxu0 %v564
    %584 = vmatprep.subr.bf16.mxu0 0
    %585 = vmatpush2.bf16.msra.mxu0 0
    %586 = vmatprep.subr.bf16.mxu0 0
    %587 = vmatpush2.bf16.msra.mxu0 0
    %588 = vmatprep.subr.bf16.mxu0 0
    %589 = vmatpush2.bf16.msra.mxu0 0
    %590 = vmatprep.subr.bf16.mxu0 0
    %591 = vmatpush2.bf16.msra.mxu0 0
    %592 = vmatprep.subr.bf16.mxu0 0
    %593 = vmatpush2.bf16.msra.mxu0 0
    %594 = vmatprep.subr.bf16.mxu0 0
    %595 = vmatpush2.bf16.msra.mxu0 0
    %596 = vmatprep.subr.bf16.mxu0 0
    %597 = vmatpush2.bf16.msra.mxu0 0
    %598 = vmatprep.subr.bf16.mxu0 0
    %599 = vmatpush2.bf16.msra.mxu0 0
    %600 = vmatprep.mubr.bf16.mxu0 0
    %601 = vmatmul.mubr.bf16.gmra.mxu0 %v65
    %v602 = vpop.f32.mrf.mxu0
    %v603 = vadd.f32 %v555, %v602
    %v604 = vpop.f32.mrf.mxu0
    %v605 = vpop.f32.mrf.mxu0
    %v606 = vpop.f32.mrf.mxu0
    %607 = vdwg.mxu0
    %v608 = vmax.f32 %v603, 0.0
    %v609 = vpack.c.bf16 %v608, %v608
    %v610 = vld [vmem:[#allocation5 + $0x100] sm:$0xf]
    %v611 = vld [vmem:[#allocation5 + $0x104] sm:$0xf]
    %v612 = vld [vmem:[#allocation5 + $0x108] sm:$0xf]
    %v613 = vld [vmem:[#allocation5 + $0x10c] sm:$0xf]
    %v614 = vld [vmem:[#allocation5 + $0x110] sm:$0xf]
    %v615 = vld [vmem:[#allocation5 + $0x114] sm:$0xf]
    %v616 = vld [vmem:[#allocation5 + $0x118] sm:$0xf]
    %v617 = vld [vmem:[#allocation5 + $0x11c] sm:$0xf]
    %v618 = vld [vmem:[#allocation5 + $0x120] sm:$0xf]
    %v619 = vld [vmem:[#allocation5 + $0x124] sm:$0xf]
    %v620 = vld [vmem:[#allocation5 + $0x128] sm:$0xf]
    %v621 = vld [vmem:[#allocation5 + $0x12c] sm:$0xf]
    %v622 = vld [vmem:[#allocation5 + $0x130] sm:$0xf]
    %v623 = vld [vmem:[#allocation5 + $0x134] sm:$0xf]
    %v624 = vld [vmem:[#allocation5 + $0x138] sm:$0xf]
    %v625 = vld [vmem:[#allocation5 + $0x13c] sm:$0xf]
    %v642 = vunpack.c.l.b16 %v610
    %v643 = vunpack.c.l.b16 %v611
    %v644 = vunpack.c.l.b16 %v612
    %v645 = vunpack.c.l.b16 %v613
    %v646 = vunpack.c.l.b16 %v614
    %v647 = vunpack.c.l.b16 %v615
    %v648 = vunpack.c.l.b16 %v616
    %v649 = vunpack.c.l.b16 %v617
    %v650 = vunpack.c.l.b16 %v618
    %v651 = vunpack.c.l.b16 %v619
    %v652 = vunpack.c.l.b16 %v620
    %v653 = vunpack.c.l.b16 %v621
    %v654 = vunpack.c.l.b16 %v622
    %v655 = vunpack.c.l.b16 %v623
    %v656 = vunpack.c.l.b16 %v624
    %v657 = vunpack.c.l.b16 %v625
    %v658 = vpack.c.b16 %v643, %v642
    %v659 = vpack.c.b16 %v645, %v644
    %v660 = vpack.c.b16 %v647, %v646
    %v661 = vpack.c.b16 %v649, %v648
    %v662 = vpack.c.b16 %v651, %v650
    %v663 = vpack.c.b16 %v653, %v652
    %v664 = vpack.c.b16 %v655, %v654
    %v665 = vpack.c.b16 %v657, %v656
    %674 = vmatprep.subr.bf16.mxu0 0
    %675 = vmatpush1.bf16.msra.mxu0 %v665
    %676 = vmatprep.subr.bf16.mxu0 0
    %677 = vmatpush1.bf16.msra.mxu0 %v664
    %678 = vmatprep.subr.bf16.mxu0 0
    %679 = vmatpush1.bf16.msra.mxu0 %v663
    %680 = vmatprep.subr.bf16.mxu0 0
    %681 = vmatpush1.bf16.msra.mxu0 %v662
    %682 = vmatprep.subr.bf16.mxu0 0
    %683 = vmatpush1.bf16.msra.mxu0 %v661
    %684 = vmatprep.subr.bf16.mxu0 0
    %685 = vmatpush1.bf16.msra.mxu0 %v660
    %686 = vmatprep.subr.bf16.mxu0 0
    %687 = vmatpush1.bf16.msra.mxu0 %v659
    %688 = vmatprep.subr.bf16.mxu0 0
    %689 = vmatpush1.bf16.msra.mxu0 %v658
    %690 = vmatprep.subr.bf16.mxu0 0
    %691 = vmatpush2.bf16.msra.mxu0 0
    %692 = vmatprep.subr.bf16.mxu0 0
    %693 = vmatpush2.bf16.msra.mxu0 0
    %694 = vmatprep.subr.bf16.mxu0 0
    %695 = vmatpush2.bf16.msra.mxu0 0
    %696 = vmatprep.subr.bf16.mxu0 0
    %697 = vmatpush2.bf16.msra.mxu0 0
    %698 = vmatprep.subr.bf16.mxu0 0
    %699 = vmatpush2.bf16.msra.mxu0 0
    %700 = vmatprep.subr.bf16.mxu0 0
    %701 = vmatpush2.bf16.msra.mxu0 0
    %702 = vmatprep.subr.bf16.mxu0 0
    %703 = vmatpush2.bf16.msra.mxu0 0
    %704 = vmatprep.subr.bf16.mxu0 0
    %705 = vmatpush2.bf16.msra.mxu0 0
    %706 = vmatprep.mubr.bf16.mxu0 0
    %707 = vmatmul.mubr.bf16.gmra.mxu0 %v609
    %v708 = vpop.f32.mrf.mxu0
    %v709 = vadd.f32 0.0, %v708
    %v710 = vpop.f32.mrf.mxu0
    %v711 = vpop.f32.mrf.mxu0
    %v712 = vpop.f32.mrf.mxu0
    %713 = vdwg.mxu0
    %v714 = vadd.f32 %v547, %v709
    %v715 = vld [vmem:[#allocation5 + $0x180] sm:$0x4]
    %v716 = vunpack.c.l.bf16 %v715
    %v717 = vlaneseq
    %v718 = vshrl.u32 %v717, 7
    %v719 = vsub.s32 4, %v718
    %v720 = vrot.slane %v716, %v719
    %v721 = vadd.f32 %v714, %v720
    %v722 = vmax.f32 %v721, 0.0
    %v723 = vpack.c.bf16 %v722, %v722
    %v724 = vld [vmem:[#allocation5 + $0x140] sm:$0xf]
    %v725 = vld [vmem:[#allocation5 + $0x144] sm:$0xf]
    %v726 = vld [vmem:[#allocation5 + $0x148] sm:$0xf]
    %v727 = vld [vmem:[#allocation5 + $0x14c] sm:$0xf]
    %v728 = vld [vmem:[#allocation5 + $0x150] sm:$0xf]
    %v729 = vld [vmem:[#allocation5 + $0x154] sm:$0xf]
    %v730 = vld [vmem:[#allocation5 + $0x158] sm:$0xf]
    %v731 = vld [vmem:[#allocation5 + $0x15c] sm:$0xf]
    %v732 = vld [vmem:[#allocation5 + $0x160] sm:$0xf]
    %v733 = vld [vmem:[#allocation5 + $0x164] sm:$0xf]
    %v734 = vld [vmem:[#allocation5 + $0x168] sm:$0xf]
    %v735 = vld [vmem:[#allocation5 + $0x16c] sm:$0xf]
    %v736 = vld [vmem:[#allocation5 + $0x170] sm:$0xf]
    %v737 = vld [vmem:[#allocation5 + $0x174] sm:$0xf]
    %v738 = vld [vmem:[#allocation5 + $0x178] sm:$0xf]
    %v739 = vld [vmem:[#allocation5 + $0x17c] sm:$0xf]
    %v740 = vlaneseq
    %v741 = vshrl.u32 %v740, 7
    %v742 = vsub.s32 5, %v741
    %v743 = vrot.slane %v716, %v742
    %v760 = vunpack.c.l.b16 %v724
    %v761 = vunpack.c.l.b16 %v725
    %v762 = vunpack.c.l.b16 %v726
    %v763 = vunpack.c.l.b16 %v727
    %v764 = vunpack.c.l.b16 %v728
    %v765 = vunpack.c.l.b16 %v729
    %v766 = vunpack.c.l.b16 %v730
    %v767 = vunpack.c.l.b16 %v731
    %v768 = vunpack.c.l.b16 %v732
    %v769 = vunpack.c.l.b16 %v733
    %v770 = vunpack.c.l.b16 %v734
    %v771 = vunpack.c.l.b16 %v735
    %v772 = vunpack.c.l.b16 %v736
    %v773 = vunpack.c.l.b16 %v737
    %v774 = vunpack.c.l.b16 %v738
    %v775 = vunpack.c.l.b16 %v739
    %v776 = vpack.c.b16 %v761, %v760
    %v777 = vpack.c.b16 %v763, %v762
    %v778 = vpack.c.b16 %v765, %v764
    %v779 = vpack.c.b16 %v767, %v766
    %v780 = vpack.c.b16 %v769, %v768
    %v781 = vpack.c.b16 %v771, %v770
    %v782 = vpack.c.b16 %v773, %v772
    %v783 = vpack.c.b16 %v775, %v774
    %792 = vmatprep.subr.bf16.mxu0 0
    %793 = vmatpush1.bf16.msra.mxu0 %v783
    %794 = vmatprep.subr.bf16.mxu0 0
    %795 = vmatpush1.bf16.msra.mxu0 %v782
    %796 = vmatprep.subr.bf16.mxu0 0
    %797 = vmatpush1.bf16.msra.mxu0 %v781
    %798 = vmatprep.subr.bf16.mxu0 0
    %799 = vmatpush1.bf16.msra.mxu0 %v780
    %800 = vmatprep.subr.bf16.mxu0 0
    %801 = vmatpush1.bf16.msra.mxu0 %v779
    %802 = vmatprep.subr.bf16.mxu0 0
    %803 = vmatpush1.bf16.msra.mxu0 %v778
    %804 = vmatprep.subr.bf16.mxu0 0
    %805 = vmatpush1.bf16.msra.mxu0 %v777
    %806 = vmatprep.subr.bf16.mxu0 0
    %807 = vmatpush1.bf16.msra.mxu0 %v776
    %808 = vmatprep.subr.bf16.mxu0 0
    %809 = vmatpush2.bf16.msra.mxu0 0
    %810 = vmatprep.subr.bf16.mxu0 0
    %811 = vmatpush2.bf16.msra.mxu0 0
    %812 = vmatprep.subr.bf16.mxu0 0
    %813 = vmatpush2.bf16.msra.mxu0 0
    %814 = vmatprep.subr.bf16.mxu0 0
    %815 = vmatpush2.bf16.msra.mxu0 0
    %816 = vmatprep.subr.bf16.mxu0 0
    %817 = vmatpush2.bf16.msra.mxu0 0
    %818 = vmatprep.subr.bf16.mxu0 0
    %819 = vmatpush2.bf16.msra.mxu0 0
    %820 = vmatprep.subr.bf16.mxu0 0
    %821 = vmatpush2.bf16.msra.mxu0 0
    %822 = vmatprep.subr.bf16.mxu0 0
    %823 = vmatpush2.bf16.msra.mxu0 0
    %824 = vmatprep.mubr.bf16.mxu0 0
    %825 = vmatmul.mubr.bf16.gmra.mxu0 %v723
    %v826 = vpop.f32.mrf.mxu0
    %v827 = vadd.f32 %v743, %v826
    %v828 = vpop.f32.mrf.mxu0
    %v829 = vpop.f32.mrf.mxu0
    %v830 = vpop.f32.mrf.mxu0
    %831 = vdwg.mxu0
    %v832 = vtanh.pop %v827
    %v833 = vmul.f32 %v832, 3.1415927
    %834 = vst [vmem:[#allocation7] sm:$0xff] %v833
    // Predicated region
    $region18: #{actor_forward.1} parent=1 // pred_check
      _
    $region19: #{actor_forward.1} parent=1 // pred_check_branch
      %836 = sbr.rel (0) target = $region21
    $region20: #{actor_forward.1} parent=1 // pred_region
      %s838 = ssub.s32 128, 128
      %839 = vsyncadd [#allocation4], %s838
      %s841 = sshll.u32 [#allocation7], 4
      %s842 = int_to_ptr.vmem [resolvable:$true] %s841
      %844 = dma.vmem_to_hbm [thread:$0]  %s842, 128, %s2, [#allocation4]
    $region21: #{actor_forward.1} parent=1 // pred_fallthru
      _
    // Predicated region
    $region22: #{actor_forward.1} parent=1 // pred_check
      _
    $region23: #{actor_forward.1} parent=1 // pred_check_branch
      %846 = sbr.rel (0) target = $region25
    $region24: #{actor_forward.1} parent=1 // pred_region
      %847 = dma.done [#allocation4], 128
    $region25: #{actor_forward.1} parent=1 // pred_fallthru
      _
    %848 = vsyncpa [#allocation3], 1
    %849 = vsyncpa [#allocation6], 1
    %850 = vsyncpa [#allocation4], 1

</llo_original>
